<compile_context>
chip_gen: v5e
topology: v5e:2x2
jax: 0.10.0
libtpu: 0.0.40
codegen_flags: <defaults>
</compile_context>

<pallas_src>
import functools
import math

import jax
import jax.numpy as jnp
from jax import lax
from jax.experimental import pallas as pl
from jax.experimental.pallas import tpu as pltpu


def _mha_kernel(x_ref, wqkv_ref, bqkv_ref, wo_ref, bo_ref, o_ref, *,
                num_heads, scale_inv):
    """Fused MHA forward for one batch element: (N, E) -> (N, E)."""
    x = x_ref[0]                                                       # (N, E)
    n, e = x.shape
    d = e // num_heads

    # Fused Q/K/V projection: one (N, E) @ (E, 3E) MXU matmul, f32 accumulate.
    qkv = jnp.dot(x, wqkv_ref[...], preferred_element_type=jnp.float32)
    qkv = qkv + bqkv_ref[...].astype(jnp.float32)                      # (N, 3E)

    # Pre-scale queries (cheaper than scaling each (N, N) energy tile).
    q = qkv[:, 0 * e:1 * e] * jnp.float32(scale_inv)                   # (N, E)
    k = qkv[:, 1 * e:2 * e]                                            # (N, E)
    v = qkv[:, 2 * e:3 * e]                                            # (N, E)

    head_outs = []
    for h in range(num_heads):                       # unrolled at trace time
        lo = h * d
        qh = q[:, lo:lo + d]                                           # (N, D)
        kh = k[:, lo:lo + d]                                           # (N, D)
        vh = v[:, lo:lo + d]                                           # (N, D)

        # energy[q, k] = sum_d qh[q, d] * kh[k, d]   (no explicit transpose)
        energy = lax.dot_general(
            qh, kh, (((1,), (1,)), ((), ())),
            preferred_element_type=jnp.float32)                        # (N, N)

        # numerically-stable softmax over keys
        m = jnp.max(energy, axis=-1, keepdims=True)
        p = jnp.exp(energy - m)
        l = jnp.sum(p, axis=-1, keepdims=True)
        att = p / l                                                    # (N, N)

        head_outs.append(
            jnp.dot(att, vh, preferred_element_type=jnp.float32))      # (N, D)

    merged = jnp.concatenate(head_outs, axis=-1)                       # (N, E)
    out = jnp.dot(merged, wo_ref[...], preferred_element_type=jnp.float32) \
        + bo_ref[...].astype(jnp.float32)

    o_ref[0] = out.astype(o_ref.dtype)


def multi_head_attention(x, wq, wk, wv, wo, bq, bk, bv, bo, *, num_heads):
    """x: (B, N, E); weights: (E, E); biases: (1, E). Returns (B, N, E)."""
    B, N, E = x.shape
    assert E % num_heads == 0, "emb_size must be divisible by num_heads"
    scale_inv = 1.0 / math.sqrt(E)   # module divides by emb_size ** 0.5

    # One-time weight fusion (amortized; in a real model store them pre-fused).
    wqkv = jnp.concatenate([wq, wk, wv], axis=1)                       # (E, 3E)
    bqkv = jnp.concatenate([bq, bk, bv], axis=1)                       # (1, 3E)

    kernel = functools.partial(_mha_kernel, num_heads=num_heads,
                               scale_inv=scale_inv)

    itemsize = jnp.dtype(x.dtype).itemsize
    flops = B * (8 * N * E * E + 4 * N * N * E)     # qkv + out proj + 2 attn matmuls
    transcendentals = B * num_heads * N * N         # exp() in softmax
    bytes_accessed = (2 * B * N * E + 4 * E * E + 4 * E) * itemsize

    return pl.pallas_call(
        kernel,
        out_shape=jax.ShapeDtypeStruct((B, N, E), x.dtype),
        grid_spec=pltpu.PrefetchScalarGridSpec(
            num_scalar_prefetch=0,
            grid=(B,),
            in_specs=[
                pl.BlockSpec((1, N, E), lambda b: (b, 0, 0)),    # x (per batch)
                pl.BlockSpec((E, 3 * E), lambda b: (0, 0)),      # Wqkv (resident)
                pl.BlockSpec((1, 3 * E), lambda b: (0, 0)),      # bqkv (resident)
                pl.BlockSpec((E, E), lambda b: (0, 0)),          # Wo   (resident)
                pl.BlockSpec((1, E), lambda b: (0, 0)),          # bo   (resident)
            ],
            out_specs=pl.BlockSpec((1, N, E), lambda b: (b, 0, 0)),
        ),
        compiler_params=pltpu.CompilerParams(
            dimension_semantics=("parallel",),
        ),
        cost_estimate=pl.CostEstimate(
            flops=flops,
            transcendentals=transcendentals,
            bytes_accessed=bytes_accessed,
        ),
    )(x, wqkv, bqkv, wo, bo)


def _reference(x, wq, wk, wv, wo, bq, bk, bv, bo, num_heads):
    """Pure-JAX reference of the same forward pass (f32-accurate matmuls)."""
    B, N, E = x.shape
    D = E // num_heads
    with jax.default_matmul_precision("highest"):
        q = jnp.einsum("bne,ef->bnf", x, wq) + bq
        k = jnp.einsum("bne,ef->bnf", x, wk) + bk
        v = jnp.einsum("bne,ef->bnf", x, wv) + bv
        qh = q.reshape(B, N, num_heads, D).transpose(0, 2, 1, 3)
        kh = k.reshape(B, N, num_heads, D).transpose(0, 2, 1, 3)
        vh = v.reshape(B, N, num_heads, D).transpose(0, 2, 1, 3)
        energy = jnp.einsum("bhqd,bhkd->bhqk", qh, kh)
        att = jax.nn.softmax(energy / jnp.sqrt(jnp.float32(E)), axis=-1)
        o = jnp.einsum("bhqk,bhkd->bhqd", att, vh)
        o = o.transpose(0, 2, 1, 3).reshape(B, N, E)
        out = jnp.einsum("bne,ef->bnf", o, wo) + bo
    return out


if __name__ == "__main__":
    key = jax.random.PRNGKey(0)
    keys = jax.random.split(key, 9)

    B, N, E, H = 2, 8, 32, 4   # batch, seq, emb_size, num_heads

    x = jax.random.normal(keys[0], (B, N, E), dtype=jnp.float32)

    w_scale = 1.0 / math.sqrt(E)
    wq = jax.random.normal(keys[1], (E, E), dtype=jnp.float32) * w_scale
    wk = jax.random.normal(keys[2], (E, E), dtype=jnp.float32) * w_scale
    wv = jax.random.normal(keys[3], (E, E), dtype=jnp.float32) * w_scale
    wo = jax.random.normal(keys[4], (E, E), dtype=jnp.float32) * w_scale
    bq = jax.random.normal(keys[5], (1, E), dtype=jnp.float32) * 0.1
    bk = jax.random.normal(keys[6], (1, E), dtype=jnp.float32) * 0.1
    bv = jax.random.normal(keys[7], (1, E), dtype=jnp.float32) * 0.1
    bo = jax.random.normal(keys[8], (1, E), dtype=jnp.float32) * 0.1

    out = multi_head_attention(x, wq, wk, wv, wo, bq, bk, bv, bo, num_heads=H)
    out = jax.block_until_ready(out)

    ref = _reference(x, wq, wk, wv, wo, bq, bk, bv, bo, num_heads=H)

    assert out.shape == (B, N, E)
    assert jnp.allclose(out, ref, atol=1e-3, rtol=1e-3), "mismatch vs reference"

    print("KERNEL_OK")
</pallas_src>

<mosaic_0001>
module attributes {stable_mosaic.version = 11 : i64} {
  func.func @_mha_kernel(%arg0: i32, %arg1: memref<1x8x32xf32, #tpu.memory_space<vmem>>, %arg2: memref<32x96xf32, #tpu.memory_space<vmem>>, %arg3: memref<1x96xf32, #tpu.memory_space<vmem>>, %arg4: memref<32x32xf32, #tpu.memory_space<vmem>>, %arg5: memref<1x32xf32, #tpu.memory_space<vmem>>, %arg6: memref<1x8x32xf32, #tpu.memory_space<vmem>>) attributes {dimension_semantics = [#tpu.dimension_semantics<parallel>], iteration_bounds = array<i64: 2>, scalar_prefetch = 0 : i64, scratch_operands = 0 : i64, tpu.core_type = #tpu.core_type<tc>, window_params = [{transform_indices = @transform_0, window_bounds = array<i64: 1, 8, 32>}, {pipeline_mode = #tpu.pipeline_mode<synchronous>, transform_indices = @transform_1, window_bounds = array<i64: 32, 96>}, {pipeline_mode = #tpu.pipeline_mode<synchronous>, transform_indices = @transform_2, window_bounds = array<i64: 1, 96>}, {pipeline_mode = #tpu.pipeline_mode<synchronous>, transform_indices = @transform_3, window_bounds = array<i64: 32, 32>}, {pipeline_mode = #tpu.pipeline_mode<synchronous>, transform_indices = @transform_4, window_bounds = array<i64: 1, 32>}, {transform_indices = @transform_5, window_bounds = array<i64: 1, 8, 32>}]} {
    %c0 = arith.constant 0 : index
    %c0_0 = arith.constant 0 : index
    %c0_1 = arith.constant 0 : index
    %0 = vector.load %arg1[%c0, %c0_0, %c0_1] : memref<1x8x32xf32, #tpu.memory_space<vmem>>, vector<1x8x32xf32>
    %1 = vector.shape_cast %0 : vector<1x8x32xf32> to vector<8x32xf32>
    %c0_2 = arith.constant 0 : index
    %c0_3 = arith.constant 0 : index
    %2 = vector.load %arg2[%c0_2, %c0_3] : memref<32x96xf32, #tpu.memory_space<vmem>>, vector<32x96xf32>
    %cst = arith.constant dense<0.000000e+00> : vector<8x96xf32>
    %3 = tpu.matmul %1, %2, %cst {dimension_numbers = #tpu.dot_dimension_numbers<[1], [0], [0], [1], [0, 0, 1, 1], [], []>} : vector<8x32xf32>, vector<32x96xf32>, vector<8x96xf32> -> vector<8x96xf32>
    %c0_4 = arith.constant 0 : index
    %c0_5 = arith.constant 0 : index
    %4 = vector.load %arg3[%c0_4, %c0_5] : memref<1x96xf32, #tpu.memory_space<vmem>>, vector<1x96xf32>
    %5 = vector.broadcast %4 : vector<1x96xf32> to vector<8x96xf32>
    %6 = arith.addf %3, %5 : vector<8x96xf32>
    %7 = vector.extract_strided_slice %6 {offsets = [0, 0], sizes = [8, 32], strides = [1, 1]} : vector<8x96xf32> to vector<8x32xf32>
    %cst_6 = arith.constant 0.176776692 : f32
    %8 = vector.broadcast %cst_6 : f32 to vector<8x32xf32>
    %9 = arith.mulf %7, %8 : vector<8x32xf32>
    %10 = vector.extract_strided_slice %6 {offsets = [0, 32], sizes = [8, 32], strides = [1, 1]} : vector<8x96xf32> to vector<8x32xf32>
    %11 = vector.extract_strided_slice %6 {offsets = [0, 64], sizes = [8, 32], strides = [1, 1]} : vector<8x96xf32> to vector<8x32xf32>
    %12 = vector.extract_strided_slice %9 {offsets = [0, 0], sizes = [8, 8], strides = [1, 1]} : vector<8x32xf32> to vector<8x8xf32>
    %13 = vector.extract_strided_slice %10 {offsets = [0, 0], sizes = [8, 8], strides = [1, 1]} : vector<8x32xf32> to vector<8x8xf32>
    %14 = vector.extract_strided_slice %11 {offsets = [0, 0], sizes = [8, 8], strides = [1, 1]} : vector<8x32xf32> to vector<8x8xf32>
    %cst_7 = arith.constant dense<0.000000e+00> : vector<8x8xf32>
    %15 = tpu.matmul %12, %13, %cst_7 {dimension_numbers = #tpu.dot_dimension_numbers<[1], [1], [0], [0], [0, 0, 1, 0], [], []>} : vector<8x8xf32>, vector<8x8xf32>, vector<8x8xf32> -> vector<8x8xf32>
    %cst_8 = arith.constant dense<0xFF800000> : vector<8xf32>
    %16 = vector.multi_reduction <maximumf>, %15, %cst_8 [1] : vector<8x8xf32> to vector<8xf32>
    %17 = vector.shape_cast %16 : vector<8xf32> to vector<8x1xf32>
    %18 = vector.broadcast %17 : vector<8x1xf32> to vector<8x8xf32>
    %19 = arith.subf %15, %18 : vector<8x8xf32>
    %20 = math.exp %19 : vector<8x8xf32>
    %cst_9 = arith.constant dense<0.000000e+00> : vector<8xf32>
    %21 = vector.multi_reduction <add>, %20, %cst_9 [1] : vector<8x8xf32> to vector<8xf32>
    %22 = vector.shape_cast %21 : vector<8xf32> to vector<8x1xf32>
    %23 = vector.broadcast %22 : vector<8x1xf32> to vector<8x8xf32>
    %24 = arith.divf %20, %23 : vector<8x8xf32>
    %cst_10 = arith.constant dense<0.000000e+00> : vector<8x8xf32>
    %25 = tpu.matmul %24, %14, %cst_10 {dimension_numbers = #tpu.dot_dimension_numbers<[1], [0], [0], [1], [0, 0, 1, 1], [], []>} : vector<8x8xf32>, vector<8x8xf32>, vector<8x8xf32> -> vector<8x8xf32>
    %26 = vector.extract_strided_slice %9 {offsets = [0, 8], sizes = [8, 8], strides = [1, 1]} : vector<8x32xf32> to vector<8x8xf32>
    %27 = vector.extract_strided_slice %10 {offsets = [0, 8], sizes = [8, 8], strides = [1, 1]} : vector<8x32xf32> to vector<8x8xf32>
    %28 = vector.extract_strided_slice %11 {offsets = [0, 8], sizes = [8, 8], strides = [1, 1]} : vector<8x32xf32> to vector<8x8xf32>
    %cst_11 = arith.constant dense<0.000000e+00> : vector<8x8xf32>
    %29 = tpu.matmul %26, %27, %cst_11 {dimension_numbers = #tpu.dot_dimension_numbers<[1], [1], [0], [0], [0, 0, 1, 0], [], []>} : vector<8x8xf32>, vector<8x8xf32>, vector<8x8xf32> -> vector<8x8xf32>
    %cst_12 = arith.constant dense<0xFF800000> : vector<8xf32>
    %30 = vector.multi_reduction <maximumf>, %29, %cst_12 [1] : vector<8x8xf32> to vector<8xf32>
    %31 = vector.shape_cast %30 : vector<8xf32> to vector<8x1xf32>
    %32 = vector.broadcast %31 : vector<8x1xf32> to vector<8x8xf32>
    %33 = arith.subf %29, %32 : vector<8x8xf32>
    %34 = math.exp %33 : vector<8x8xf32>
    %cst_13 = arith.constant dense<0.000000e+00> : vector<8xf32>
    %35 = vector.multi_reduction <add>, %34, %cst_13 [1] : vector<8x8xf32> to vector<8xf32>
    %36 = vector.shape_cast %35 : vector<8xf32> to vector<8x1xf32>
    %37 = vector.broadcast %36 : vector<8x1xf32> to vector<8x8xf32>
    %38 = arith.divf %34, %37 : vector<8x8xf32>
    %cst_14 = arith.constant dense<0.000000e+00> : vector<8x8xf32>
    %39 = tpu.matmul %38, %28, %cst_14 {dimension_numbers = #tpu.dot_dimension_numbers<[1], [0], [0], [1], [0, 0, 1, 1], [], []>} : vector<8x8xf32>, vector<8x8xf32>, vector<8x8xf32> -> vector<8x8xf32>
    %40 = vector.extract_strided_slice %9 {offsets = [0, 16], sizes = [8, 8], strides = [1, 1]} : vector<8x32xf32> to vector<8x8xf32>
    %41 = vector.extract_strided_slice %10 {offsets = [0, 16], sizes = [8, 8], strides = [1, 1]} : vector<8x32xf32> to vector<8x8xf32>
    %42 = vector.extract_strided_slice %11 {offsets = [0, 16], sizes = [8, 8], strides = [1, 1]} : vector<8x32xf32> to vector<8x8xf32>
    %cst_15 = arith.constant dense<0.000000e+00> : vector<8x8xf32>
    %43 = tpu.matmul %40, %41, %cst_15 {dimension_numbers = #tpu.dot_dimension_numbers<[1], [1], [0], [0], [0, 0, 1, 0], [], []>} : vector<8x8xf32>, vector<8x8xf32>, vector<8x8xf32> -> vector<8x8xf32>
    %cst_16 = arith.constant dense<0xFF800000> : vector<8xf32>
    %44 = vector.multi_reduction <maximumf>, %43, %cst_16 [1] : vector<8x8xf32> to vector<8xf32>
    %45 = vector.shape_cast %44 : vector<8xf32> to vector<8x1xf32>
    %46 = vector.broadcast %45 : vector<8x1xf32> to vector<8x8xf32>
    %47 = arith.subf %43, %46 : vector<8x8xf32>
    %48 = math.exp %47 : vector<8x8xf32>
    %cst_17 = arith.constant dense<0.000000e+00> : vector<8xf32>
    %49 = vector.multi_reduction <add>, %48, %cst_17 [1] : vector<8x8xf32> to vector<8xf32>
    %50 = vector.shape_cast %49 : vector<8xf32> to vector<8x1xf32>
    %51 = vector.broadcast %50 : vector<8x1xf32> to vector<8x8xf32>
    %52 = arith.divf %48, %51 : vector<8x8xf32>
    %cst_18 = arith.constant dense<0.000000e+00> : vector<8x8xf32>
    %53 = tpu.matmul %52, %42, %cst_18 {dimension_numbers = #tpu.dot_dimension_numbers<[1], [0], [0], [1], [0, 0, 1, 1], [], []>} : vector<8x8xf32>, vector<8x8xf32>, vector<8x8xf32> -> vector<8x8xf32>
    %54 = vector.extract_strided_slice %9 {offsets = [0, 24], sizes = [8, 8], strides = [1, 1]} : vector<8x32xf32> to vector<8x8xf32>
    %55 = vector.extract_strided_slice %10 {offsets = [0, 24], sizes = [8, 8], strides = [1, 1]} : vector<8x32xf32> to vector<8x8xf32>
    %56 = vector.extract_strided_slice %11 {offsets = [0, 24], sizes = [8, 8], strides = [1, 1]} : vector<8x32xf32> to vector<8x8xf32>
    %cst_19 = arith.constant dense<0.000000e+00> : vector<8x8xf32>
    %57 = tpu.matmul %54, %55, %cst_19 {dimension_numbers = #tpu.dot_dimension_numbers<[1], [1], [0], [0], [0, 0, 1, 0], [], []>} : vector<8x8xf32>, vector<8x8xf32>, vector<8x8xf32> -> vector<8x8xf32>
    %cst_20 = arith.constant dense<0xFF800000> : vector<8xf32>
    %58 = vector.multi_reduction <maximumf>, %57, %cst_20 [1] : vector<8x8xf32> to vector<8xf32>
    %59 = vector.shape_cast %58 : vector<8xf32> to vector<8x1xf32>
    %60 = vector.broadcast %59 : vector<8x1xf32> to vector<8x8xf32>
    %61 = arith.subf %57, %60 : vector<8x8xf32>
    %62 = math.exp %61 : vector<8x8xf32>
    %cst_21 = arith.constant dense<0.000000e+00> : vector<8xf32>
    %63 = vector.multi_reduction <add>, %62, %cst_21 [1] : vector<8x8xf32> to vector<8xf32>
    %64 = vector.shape_cast %63 : vector<8xf32> to vector<8x1xf32>
    %65 = vector.broadcast %64 : vector<8x1xf32> to vector<8x8xf32>
    %66 = arith.divf %62, %65 : vector<8x8xf32>
    %cst_22 = arith.constant dense<0.000000e+00> : vector<8x8xf32>
    %67 = tpu.matmul %66, %56, %cst_22 {dimension_numbers = #tpu.dot_dimension_numbers<[1], [0], [0], [1], [0, 0, 1, 1], [], []>} : vector<8x8xf32>, vector<8x8xf32>, vector<8x8xf32> -> vector<8x8xf32>
    %68 = tpu.concatenate %25, %39, %53, %67 in 1 : vector<8x8xf32>, vector<8x8xf32>, vector<8x8xf32>, vector<8x8xf32> -> vector<8x32xf32>
    %c0_23 = arith.constant 0 : index
    %c0_24 = arith.constant 0 : index
    %69 = vector.load %arg4[%c0_23, %c0_24] : memref<32x32xf32, #tpu.memory_space<vmem>>, vector<32x32xf32>
    %cst_25 = arith.constant dense<0.000000e+00> : vector<8x32xf32>
    %70 = tpu.matmul %68, %69, %cst_25 {dimension_numbers = #tpu.dot_dimension_numbers<[1], [0], [0], [1], [0, 0, 1, 1], [], []>} : vector<8x32xf32>, vector<32x32xf32>, vector<8x32xf32> -> vector<8x32xf32>
    %c0_26 = arith.constant 0 : index
    %c0_27 = arith.constant 0 : index
    %71 = vector.load %arg5[%c0_26, %c0_27] : memref<1x32xf32, #tpu.memory_space<vmem>>, vector<1x32xf32>
    %72 = vector.broadcast %71 : vector<1x32xf32> to vector<8x32xf32>
    %73 = arith.addf %70, %72 : vector<8x32xf32>
    %c0_28 = arith.constant 0 : index
    %c0_29 = arith.constant 0 : index
    %c0_30 = arith.constant 0 : index
    %74 = vector.load %arg6[%c0_28, %c0_29, %c0_30] : memref<1x8x32xf32, #tpu.memory_space<vmem>>, vector<1x8x32xf32>
    %75 = vector.shape_cast %74 : vector<1x8x32xf32> to vector<8x32xf32>
    %76 = vector.shape_cast %73 : vector<8x32xf32> to vector<1x8x32xf32>
    tpu.vector_store %arg6[%c0_28, %c0_29, %c0_30], %76 {strides = array<i32>} : memref<1x8x32xf32, #tpu.memory_space<vmem>>, vector<1x8x32xf32>,
    return
  }
  func.func @transform_0(%arg0: i32) -> (i32, i32, i32) {
    %c0_i32 = arith.constant 0 : i32
    %c0_i32_0 = arith.constant 0 : i32
    %c0_i32_1 = arith.constant 0 : i32
    return %arg0, %c0_i32, %c0_i32_0 : i32, i32, i32
  }
  func.func @transform_1(%arg0: i32) -> (i32, i32) {
    %c0_i32 = arith.constant 0 : i32
    %c0_i32_0 = arith.constant 0 : i32
    %c0_i32_1 = arith.constant 0 : i32
    return %c0_i32, %c0_i32_0 : i32, i32
  }
  func.func @transform_2(%arg0: i32) -> (i32, i32) {
    %c0_i32 = arith.constant 0 : i32
    %c0_i32_0 = arith.constant 0 : i32
    %c0_i32_1 = arith.constant 0 : i32
    return %c0_i32, %c0_i32_0 : i32, i32
  }
  func.func @transform_3(%arg0: i32) -> (i32, i32) {
    %c0_i32 = arith.constant 0 : i32
    %c0_i32_0 = arith.constant 0 : i32
    %c0_i32_1 = arith.constant 0 : i32
    return %c0_i32, %c0_i32_0 : i32, i32
  }
  func.func @transform_4(%arg0: i32) -> (i32, i32) {
    %c0_i32 = arith.constant 0 : i32
    %c0_i32_0 = arith.constant 0 : i32
    %c0_i32_1 = arith.constant 0 : i32
    return %c0_i32, %c0_i32_0 : i32, i32
  }
  func.func @transform_5(%arg0: i32) -> (i32, i32, i32) {
    %c0_i32 = arith.constant 0 : i32
    %c0_i32_0 = arith.constant 0 : i32
    %c0_i32_1 = arith.constant 0 : i32
    return %arg0, %c0_i32, %c0_i32_0 : i32, i32, i32
  }
}

</mosaic_0001>

<llo_original>
// kernel: tpu_custom_call.1
$region0: #{tpu_custom_call.1}
  #allocation0 [shape = 'u32[]', space=smem, size = 0x4, offset = 0x4, fixed_abs, tag = 'smem constant byte address 0x4 - core index']
  #allocation1 [shape = 'u32[72,128]{1,0:T(1,128)}', space=vmem, size = 0x9000, scoped, tag = 'internal scratch']
  %s0 = inlined_call_operand.hbm [shape: f32[2,8,32], index: 0, kind: input, shape index: {}]
  %s1 = inlined_call_operand.hbm [shape: f32[32,96], index: 1, kind: input, shape index: {}]
  %s2 = inlined_call_operand.vmem [shape: f32[1,96], index: 2, kind: input, shape index: {}]
  %s3 = inlined_call_operand.hbm [shape: f32[32,32], index: 3, kind: input, shape index: {}]
  %s4 = inlined_call_operand.vmem [shape: f32[1,32], index: 4, kind: input, shape index: {}]
  %s5 = inlined_call_operand.hbm [shape: f32[2,8,32], index: 5, kind: output, shape index: {}]
  %s6 = sld [smem:[#allocation0]]
  $region65: #{tpu_custom_call.1} parent=0
    _
  %s8 = ssub.s32 1, %s6
  %s9 = scalar_select 0, %s8, %s6
  $region1: #{tpu_custom_call.1} parent=0
    #allocation2 [shape = 'u8[8192]{0}', space=vmem, size = 0x2000, scoped, tag = 'input window, operand 0']
    #allocation3 [shape = 's32[2]{0}', space=sflag, size = 0x8, scoped, tag = 'scoped memory for tpu_custom_call.1']
    #allocation4 [shape = 's32[2]{0}', space=sflag, size = 0x8, scoped, tag = 'scoped memory for tpu_custom_call.1']
    #allocation5 [shape = 'u8[16384]{0}', space=vmem, size = 0x4000, scoped, tag = 'input window, operand 1, single buffered']
    #allocation6 [shape = 's32[1]{0}', space=sflag, size = 0x4, scoped, tag = 'scoped memory for tpu_custom_call.1']
    #allocation7 [shape = 'u8[16384]{0}', space=vmem, size = 0x4000, scoped, tag = 'input window, operand 3, single buffered']
    #allocation8 [shape = 'u8[8192]{0}', space=vmem, size = 0x2000, scoped, tag = 'output window, operand 0']
    %10 = vsyncpa [#allocation3], 0
    %s11 = scalar_lea.sflag [#allocation3], 1
    %12 = vsyncpa %s11, 0
    %13 = vsyncpa [#allocation6], 0
    %14 = vsyncpa [#allocation4], 0
    %s15 = scalar_lea.sflag [#allocation4], 1
    %16 = vsyncpa %s15, 0
    loop: start=0, step=1, limit=4
    $region2: #{tpu_custom_call.1} parent=1 // loop_pre_header
      _
    $region3: #{tpu_custom_call.1} parent=1 // loop_header
      %s18 = sphi 0, %s22
      %p19 = scmp.ge.s32.totalorder %s18, 4
      %s28 = sphi 0, %s30
      %s31 = sphi 0, %s28
      %s32 = sphi 0, %s31
      %s48 = sphi 0, %s32
      %s52 = sphi 0, %s52
      %s54 = sphi 0, %s52
      %s55 = sphi 0, %s54
      %s69 = sphi 0, %s55
      %s73 = sphi 0, %s73
      %s75 = sphi 0, %s73
      %s76 = sphi 0, %s75
      %s90 = sphi 0, %s76
      %s94 = sphi 0, %s94
      %s96 = sphi 0, %s94
      %s97 = sphi 0, %s96
      %s111 = sphi 0, %s97
      %s115 = sphi 0, %s115
      %s117 = sphi 0, %s115
      %s118 = sphi 0, %s117
      %s132 = sphi 0, %s118
      %s138 = sphi 0, %s140
      %s141 = sphi 0, %s138
      %s142 = sphi 0, %s141
      %s158 = sphi 0, %s142
    $region4: #{tpu_custom_call.1} parent=1 // loop_header_branch
      %21 = sbr.rel (%p19) target = $region8
    $region5: #{tpu_custom_call.1} parent=1 // loop_body
      %s23 = ssub.s32 %s18, 1
      %s24 = ssub.s32 %s18, 2
      %s25 = sadd.s32 %s18, 1
      %s26 = ssub.s32 %s18, %s25
      %p27 = scmp.eq.s32.totalorder %s26, 0
      %s29 = sadd.s32 %s28, 1
      %s30 = scalar_select %p27, %s28, %s29
      %p33 = pneg %p27
      %p34 = scmp.eq.s32.totalorder %s18, 1
      %p35 = por %p33, %p34
      %p36 = scmp.ne.s32.totalorder %s28, %s31
      %p37 = scmp.eq.s32.totalorder %s18, 0
      %p38 = por %p36, %p37
      %p39 = scmp.ne.s32.totalorder %s28, %s31
      %p40 = scmp.eq.s32.totalorder %s23, 1
      %p41 = por %p39, %p40
      %p42 = scmp.ne.s32.totalorder %s31, %s32
      %p43 = scmp.eq.s32.totalorder %s23, 0
      %p44 = por %p42, %p43
      %p45 = scmp.ne.s32.totalorder %s31, %s32
      %p46 = scmp.eq.s32.totalorder %s24, 1
      %p47 = por %p45, %p46
      %p49 = scmp.ne.s32.totalorder %s32, %s48
      %p50 = scmp.eq.s32.totalorder %s24, 0
      %p51 = por %p49, %p50
      %s53 = sadd.s32 %s52, 1
      %p56 = scmp.eq.s32.totalorder %s18, 1
      %p57 = scmp.ne.s32.totalorder %s52, %s54
      %p58 = scmp.eq.s32.totalorder %s18, 0
      %p59 = por %p57, %p58
      %p60 = scmp.ne.s32.totalorder %s52, %s54
      %p61 = scmp.eq.s32.totalorder %s23, 1
      %p62 = por %p60, %p61
      %p63 = scmp.ne.s32.totalorder %s54, %s55
      %p64 = scmp.eq.s32.totalorder %s23, 0
      %p65 = por %p63, %p64
      %p66 = scmp.ne.s32.totalorder %s54, %s55
      %p67 = scmp.eq.s32.totalorder %s24, 1
      %p68 = por %p66, %p67
      %p70 = scmp.ne.s32.totalorder %s55, %s69
      %p71 = scmp.eq.s32.totalorder %s24, 0
      %p72 = por %p70, %p71
      %s74 = sadd.s32 %s73, 1
      %p77 = scmp.eq.s32.totalorder %s18, 1
      %p78 = scmp.ne.s32.totalorder %s73, %s75
      %p79 = scmp.eq.s32.totalorder %s18, 0
      %p80 = por %p78, %p79
      %p81 = scmp.ne.s32.totalorder %s73, %s75
      %p82 = scmp.eq.s32.totalorder %s23, 1
      %p83 = por %p81, %p82
      %p84 = scmp.ne.s32.totalorder %s75, %s76
      %p85 = scmp.eq.s32.totalorder %s23, 0
      %p86 = por %p84, %p85
      %p87 = scmp.ne.s32.totalorder %s75, %s76
      %p88 = scmp.eq.s32.totalorder %s24, 1
      %p89 = por %p87, %p88
      %p91 = scmp.ne.s32.totalorder %s76, %s90
      %p92 = scmp.eq.s32.totalorder %s24, 0
      %p93 = por %p91, %p92
      %s95 = sadd.s32 %s94, 1
      %p98 = scmp.eq.s32.totalorder %s18, 1
      %p99 = scmp.ne.s32.totalorder %s94, %s96
      %p100 = scmp.eq.s32.totalorder %s18, 0
      %p101 = por %p99, %p100
      %p102 = scmp.ne.s32.totalorder %s94, %s96
      %p103 = scmp.eq.s32.totalorder %s23, 1
      %p104 = por %p102, %p103
      %p105 = scmp.ne.s32.totalorder %s96, %s97
      %p106 = scmp.eq.s32.totalorder %s23, 0
      %p107 = por %p105, %p106
      %p108 = scmp.ne.s32.totalorder %s96, %s97
      %p109 = scmp.eq.s32.totalorder %s24, 1
      %p110 = por %p108, %p109
      %p112 = scmp.ne.s32.totalorder %s97, %s111
      %p113 = scmp.eq.s32.totalorder %s24, 0
      %p114 = por %p112, %p113
      %s116 = sadd.s32 %s115, 1
      %p119 = scmp.eq.s32.totalorder %s18, 1
      %p120 = scmp.ne.s32.totalorder %s115, %s117
      %p121 = scmp.eq.s32.totalorder %s18, 0
      %p122 = por %p120, %p121
      %p123 = scmp.ne.s32.totalorder %s115, %s117
      %p124 = scmp.eq.s32.totalorder %s23, 1
      %p125 = por %p123, %p124
      %p126 = scmp.ne.s32.totalorder %s117, %s118
      %p127 = scmp.eq.s32.totalorder %s23, 0
      %p128 = por %p126, %p127
      %p129 = scmp.ne.s32.totalorder %s117, %s118
      %p130 = scmp.eq.s32.totalorder %s24, 1
      %p131 = por %p129, %p130
      %p133 = scmp.ne.s32.totalorder %s118, %s132
      %p134 = scmp.eq.s32.totalorder %s24, 0
      %p135 = por %p133, %p134
      %s136 = ssub.s32 %s18, %s25
      %p137 = scmp.eq.s32.totalorder %s136, 0
      %s139 = sadd.s32 %s138, 1
      %s140 = scalar_select %p137, %s138, %s139
      %p143 = pneg %p137
      %p144 = scmp.eq.s32.totalorder %s18, 1
      %p145 = por %p143, %p144
      %p146 = scmp.ne.s32.totalorder %s138, %s141
      %p147 = scmp.eq.s32.totalorder %s18, 0
      %p148 = por %p146, %p147
      %p149 = scmp.ne.s32.totalorder %s138, %s141
      %p150 = scmp.eq.s32.totalorder %s23, 1
      %p151 = por %p149, %p150
      %p152 = scmp.ne.s32.totalorder %s141, %s142
      %p153 = scmp.eq.s32.totalorder %s23, 0
      %p154 = por %p152, %p153
      %p155 = scmp.ne.s32.totalorder %s141, %s142
      %p156 = scmp.eq.s32.totalorder %s24, 1
      %p157 = por %p155, %p156
      %p159 = scmp.ne.s32.totalorder %s142, %s158
      %p160 = scmp.eq.s32.totalorder %s24, 0
      %p161 = por %p159, %p160
      %p162 = scmp.le.s32.totalorder 1, %s18
      %p163 = scmp.lt.s32.totalorder %s18, 3
      %p164 = pnand %p162, %p163
      %p165 = pneg %p164
      // Predicated region
      $region9: #{tpu_custom_call.1} parent=5 // pred_check
        _
      $region10: #{tpu_custom_call.1} parent=5 // pred_check_branch
        %167 = sbr.rel (%p164) target = $region12
      $region11: #{tpu_custom_call.1} parent=5 // pred_region
        %s168 = ssub.s32 %s18, 1
        // Predicated region
        $region13: #{tpu_custom_call.1} parent=11 // pred_check
          %p169 = pneg %p65
        $region14: #{tpu_custom_call.1} parent=11 // pred_check_branch
          %171 = sbr.rel (%p169) target = $region16
        $region15: #{tpu_custom_call.1} parent=11 // pred_region
          %173 = vsyncadd [#allocation6], 0
          %s174 = sshll.u32 %s1, 4
          %s175 = int_to_ptr.hbm [resolvable:$true] %s174
          %s176 = sshll.u32 [#allocation5], 4
          %s177 = int_to_ptr.vmem [resolvable:$true] %s176
          %182 = dma.hbm_to_vmem [thread:$0]  %s175, 512, %s177, [#allocation6], 128, 128, 8
        $region16: #{tpu_custom_call.1} parent=11 // pred_fallthru
          _
        // Predicated region
        $region17: #{tpu_custom_call.1} parent=11 // pred_check
          %p183 = pneg %p86
        $region18: #{tpu_custom_call.1} parent=11 // pred_check_branch
          %185 = sbr.rel (%p183) target = $region20
        $region19: #{tpu_custom_call.1} parent=11 // pred_region
          _
        $region20: #{tpu_custom_call.1} parent=11 // pred_fallthru
          _
        // Predicated region
        $region21: #{tpu_custom_call.1} parent=11 // pred_check
          %p186 = pneg %p107
        $region22: #{tpu_custom_call.1} parent=11 // pred_check_branch
          %188 = sbr.rel (%p186) target = $region24
        $region23: #{tpu_custom_call.1} parent=11 // pred_region
          %190 = vsyncadd [#allocation6], 0
          %s191 = sshll.u32 %s3, 4
          %s192 = int_to_ptr.hbm [resolvable:$true] %s191
          %s193 = sshll.u32 [#allocation7], 4
          %s194 = int_to_ptr.vmem [resolvable:$true] %s193
          %199 = dma.hbm_to_vmem [thread:$0]  %s192, 512, %s194, [#allocation6], 128, 128, 8
        $region24: #{tpu_custom_call.1} parent=11 // pred_fallthru
          _
        // Predicated region
        $region25: #{tpu_custom_call.1} parent=11 // pred_check
          %p200 = pneg %p128
        $region26: #{tpu_custom_call.1} parent=11 // pred_check_branch
          %202 = sbr.rel (%p200) target = $region28
        $region27: #{tpu_custom_call.1} parent=11 // pred_region
          _
        $region28: #{tpu_custom_call.1} parent=11 // pred_fallthru
          _
      $region12: #{tpu_custom_call.1} parent=5 // pred_fallthru
        _
      %p203 = scmp.lt.s32.totalorder %s18, 2
      // Predicated region
      $region29: #{tpu_custom_call.1} parent=5 // pred_check
        %p204 = pneg %p203
      $region30: #{tpu_custom_call.1} parent=5 // pred_check_branch
        %206 = sbr.rel (%p204) target = $region32
      $region31: #{tpu_custom_call.1} parent=5 // pred_region
        // Predicated region
        $region33: #{tpu_custom_call.1} parent=31 // pred_check
          %p207 = pneg %p38
        $region34: #{tpu_custom_call.1} parent=31 // pred_check_branch
          %209 = sbr.rel (%p207) target = $region36
        $region35: #{tpu_custom_call.1} parent=31 // pred_region
          %s210 = sand.u32 %s28, 1
          %s211 = scalar_lea.sflag [#allocation3], %s210
          %s212 = sand.u32 %s28, 1
          %s213 = smul.addr %s212, 8
          %s214 = scalar_lea.vmem [#allocation2], %s213
          %216 = vsyncadd %s211, 0
          %s217 = smul.addr %s18, 8
          %s218 = scalar_lea.hbm %s0, %s217
          %s220 = sshll.u32 %s218, 4
          %s221 = int_to_ptr.hbm [resolvable:$true] %s220
          %s222 = sshll.u32 %s214, 4
          %s223 = int_to_ptr.vmem [resolvable:$true] %s222
          %225 = dma.hbm_to_vmem [thread:$0]  %s221, 128, %s223, %s211
        $region36: #{tpu_custom_call.1} parent=31 // pred_fallthru
          _
      $region32: #{tpu_custom_call.1} parent=5 // pred_fallthru
        _
      %p226 = scmp.le.s32.totalorder 1, %s18
      %p227 = scmp.lt.s32.totalorder %s18, 3
      %p228 = pnand %p226, %p227
      %p229 = pneg %p228
      // Predicated region
      $region37: #{tpu_custom_call.1} parent=5 // pred_check
        _
      $region38: #{tpu_custom_call.1} parent=5 // pred_check_branch
        %231 = sbr.rel (%p228) target = $region40
      $region39: #{tpu_custom_call.1} parent=5 // pred_region
        %s232 = ssub.s32 %s18, 1
        %s233 = sand.u32 %s31, 1
        %s234 = scalar_lea.sflag [#allocation3], %s233
        %s235 = sand.u32 %s31, 1
        %s236 = smul.addr %s235, 8
        %s237 = scalar_lea.vmem [#allocation2], %s236
        // Predicated region
        $region41: #{tpu_custom_call.1} parent=39 // pred_check
          %p238 = pneg %p44
        $region42: #{tpu_custom_call.1} parent=39 // pred_check_branch
          %240 = sbr.rel (%p238) target = $region44
        $region43: #{tpu_custom_call.1} parent=39 // pred_region
          %242 = dma.done %s234, 128
        $region44: #{tpu_custom_call.1} parent=39 // pred_fallthru
          _
        // Predicated region
        $region45: #{tpu_custom_call.1} parent=39 // pred_check
          %p243 = pneg %p65
        $region46: #{tpu_custom_call.1} parent=39 // pred_check_branch
          %245 = sbr.rel (%p243) target = $region48
        $region47: #{tpu_custom_call.1} parent=39 // pred_region
          %247 = dma.done [#allocation6], 512
        $region48: #{tpu_custom_call.1} parent=39 // pred_fallthru
          _
        // Predicated region
        $region49: #{tpu_custom_call.1} parent=39 // pred_check
          %p248 = pneg %p107
        $region50: #{tpu_custom_call.1} parent=39 // pred_check_branch
          %250 = sbr.rel (%p248) target = $region52
        $region51: #{tpu_custom_call.1} parent=39 // pred_region
          %252 = dma.done [#allocation6], 512
        $region52: #{tpu_custom_call.1} parent=39 // pred_fallthru
          _
        %s253 = sand.u32 %s31, 1
        %s254 = scalar_lea.sflag [#allocation3], %s253
        %s255 = sand.u32 %s31, 1
        %s256 = smul.addr %s255, 8
        %s257 = scalar_lea.vmem [#allocation2], %s256
        %p258 = pneg %p44
        %p259 = pneg %p41
        %p260 = pneg %p65
        %p261 = pneg %p62
        %p262 = pneg %p86
        %p263 = pneg %p83
        %p264 = pneg %p107
        %p265 = pneg %p104
        %p266 = pneg %p128
        %p267 = pneg %p125
        %p268 = pneg %p154
        %p269 = pneg %p151
        %s270 = sand.u32 %s141, 1
        %s271 = scalar_lea.sflag [#allocation4], %s270
        %s272 = sand.u32 %s141, 1
        %s273 = smul.addr %s272, 8
        %s274 = scalar_lea.vmem [#allocation8], %s273
        %v275 = vld [vmem:[%s237] sm:$0xff]
        %v276 = vld [vmem:[#allocation5] sm:$0xff]
        %v277 = vld [vmem:[#allocation5 + $0x8] sm:$0xff]
        %v278 = vld [vmem:[#allocation5 + $0x10] sm:$0xff]
        %v279 = vld [vmem:[#allocation5 + $0x18] sm:$0xff]
        %v280 = vld [vmem:[%s2] sm:$0x1]
        %v282 = vperm.slane %v280, 0
        %vm284 = vcmask 261120
        %v286 = vsel %vm284, %v275, 0
        %288 = vmatpush.msra.mxu0 0.0
        %289 = vmatpush.msra.mxu0 0.0
        %290 = vmatpush.msra.mxu0 0.0
        %291 = vmatpush.msra.mxu0 0.0
        %292 = vmatpush.msra.mxu0 0.0
        %293 = vmatpush.msra.mxu0 0.0
        %294 = vmatpush.msra.mxu0 0.0
        %295 = vmatpush.msra.mxu0 0.0
        %296 = vmatpush.msra.mxu0 0.0
        %297 = vmatpush.msra.mxu0 0.0
        %298 = vmatpush.msra.mxu0 0.0
        %299 = vmatpush.msra.mxu0 0.0
        %300 = vmatpush.msra.mxu0 %v279
        %301 = vmatpush.msra.mxu0 %v278
        %302 = vmatpush.msra.mxu0 %v277
        %303 = vmatpush.msra.mxu0 %v276
        %304 = vmatmul.f32.gmra.mxu0 %v286
        %v305 = vpop.f32.mrf.mxu0
        %v306 = vadd.f32 %v282, %v305
        %307 = vdwg.mxu0
        %v308 = vmul.f32 %v306, 0.17677669
        %310 = vrot.lane.b32.xlu0 %v306, 96
        %v311 = vpop.permute.xlu0 %310
        %vm312 = vcmask 64512
        %v314 = vsel %vm312, %v308, 0
        %v316 = vsel %vm312, %v311, 0
        %318 = vmatpush.xpose.msra.mxu0 0.0
        %319 = vmatpush.xpose.msra.mxu0 0.0
        %320 = vmatpush.xpose.msra.mxu0 0.0
        %321 = vmatpush.xpose.msra.mxu0 0.0
        %322 = vmatpush.xpose.msra.mxu0 0.0
        %323 = vmatpush.xpose.msra.mxu0 0.0
        %324 = vmatpush.xpose.msra.mxu0 0.0
        %325 = vmatpush.xpose.msra.mxu0 0.0
        %326 = vmatpush.xpose.msra.mxu0 0.0
        %327 = vmatpush.xpose.msra.mxu0 0.0
        %328 = vmatpush.xpose.msra.mxu0 0.0
        %329 = vmatpush.xpose.msra.mxu0 0.0
        %330 = vmatpush.xpose.msra.mxu0 0.0
        %331 = vmatpush.xpose.msra.mxu0 0.0
        %332 = vmatpush.xpose.msra.mxu0 0.0
        %333 = vmatpush.xpose.msra.mxu0 %v316
        %334 = vmatmul.f32.gmra.mxu0 %v314
        %v335 = vpop.f32.mrf.mxu0
        %v336 = vadd.f32 0.0, %v335
        %337 = vdwg.mxu0
        %v338 = vsel %vm312, %v336, -inf
        %339 = vmax.xlane.f32.xlu0 %v338
        %v340 = vpop.xlane.xlu0 %339
        %v341 = vsub.f32 %v336, %v340
        %v342 = vmul.f32 %v341, 1.442695
        %v343 = vpow.pop %v342
        %v344 = vsel %vm312, %v343, 0.0
        %345 = vadd.xlane.f32.xlu0 %v344
        %v346 = vpop.xlane.xlu0 %345
        %v347 = vrcp.pop %v346
        %v348 = vmul.f32 %v346, %v347
        %v349 = vsub.f32 1.0, %v348
        %v350 = vmul.f32 %v347, %v349
        %v351 = vadd.f32 %v347, %v350
        %vm352 = vweird.f32 %v346
        %vm353 = vweird.f32 %v347
        %vm354 = vmor %vm352, %vm353
        %v355 = vsel %vm354, %v347, %v351
        %v356 = vand.u32 2147483647, %v346
        %vm357 = vcmp.eq.f32.partialorder %v356, 8.507059e+37
        %v358 = vand.u32 %v346, 2147483648
        %v359 = vor.u32 1.1754944e-38, %v358
        %v360 = vsel %vm357, %v359, %v355
        %v361 = vmul.f32 %v343, %v360
        %362 = vrot.lane.b32.xlu0 %v306, 64
        %v363 = vpop.permute.xlu0 %362
        %v366 = vsel %vm312, %v361, 0
        %368 = vmatpush.msra.mxu0 0.0
        %369 = vmatpush.msra.mxu0 0.0
        %370 = vmatpush.msra.mxu0 0.0
        %371 = vmatpush.msra.mxu0 0.0
        %372 = vmatpush.msra.mxu0 0.0
        %373 = vmatpush.msra.mxu0 0.0
        %374 = vmatpush.msra.mxu0 0.0
        %375 = vmatpush.msra.mxu0 0.0
        %376 = vmatpush.msra.mxu0 0.0
        %377 = vmatpush.msra.mxu0 0.0
        %378 = vmatpush.msra.mxu0 0.0
        %379 = vmatpush.msra.mxu0 0.0
        %380 = vmatpush.msra.mxu0 0.0
        %381 = vmatpush.msra.mxu0 0.0
        %382 = vmatpush.msra.mxu0 0.0
        %383 = vmatpush.msra.mxu0 %v363
        %384 = vmatmul.f32.gmra.mxu0 %v366
        %v385 = vpop.f32.mrf.mxu0
        %v386 = vadd.f32 0.0, %v385
        %387 = vdwg.mxu0
        %388 = vrot.lane.b32.xlu0 %v308, 120
        %v389 = vpop.permute.xlu0 %388
        %390 = vrot.lane.b32.xlu0 %v306, 88
        %v391 = vpop.permute.xlu0 %390
        %v392 = vsel %vm312, %v389, 0
        %v394 = vsel %vm312, %v391, 0
        %396 = vmatpush.xpose.msra.mxu0 0.0
        %397 = vmatpush.xpose.msra.mxu0 0.0
        %398 = vmatpush.xpose.msra.mxu0 0.0
        %399 = vmatpush.xpose.msra.mxu0 0.0
        %400 = vmatpush.xpose.msra.mxu0 0.0
        %401 = vmatpush.xpose.msra.mxu0 0.0
        %402 = vmatpush.xpose.msra.mxu0 0.0
        %403 = vmatpush.xpose.msra.mxu0 0.0
        %404 = vmatpush.xpose.msra.mxu0 0.0
        %405 = vmatpush.xpose.msra.mxu0 0.0
        %406 = vmatpush.xpose.msra.mxu0 0.0
        %407 = vmatpush.xpose.msra.mxu0 0.0
        %408 = vmatpush.xpose.msra.mxu0 0.0
        %409 = vmatpush.xpose.msra.mxu0 0.0
        %410 = vmatpush.xpose.msra.mxu0 0.0
        %411 = vmatpush.xpose.msra.mxu0 %v394
        %412 = vmatmul.f32.gmra.mxu0 %v392
        %v413 = vpop.f32.mrf.mxu0
        %v414 = vadd.f32 0.0, %v413
        %415 = vdwg.mxu0
        %v416 = vsel %vm312, %v414, -inf
        %417 = vmax.xlane.f32.xlu0 %v416
        %v418 = vpop.xlane.xlu0 %417
        %v419 = vsub.f32 %v414, %v418
        %v420 = vmul.f32 %v419, 1.442695
        %v421 = vpow.pop %v420
        %v422 = vsel %vm312, %v421, 0.0
        %423 = vadd.xlane.f32.xlu0 %v422
        %v424 = vpop.xlane.xlu0 %423
        %v425 = vrcp.pop %v424
        %v426 = vmul.f32 %v424, %v425
        %v427 = vsub.f32 1.0, %v426
        %v428 = vmul.f32 %v425, %v427
        %v429 = vadd.f32 %v425, %v428
        %vm430 = vweird.f32 %v424
        %vm431 = vweird.f32 %v425
        %vm432 = vmor %vm430, %vm431
        %v433 = vsel %vm432, %v425, %v429
        %v434 = vand.u32 2147483647, %v424
        %vm435 = vcmp.eq.f32.partialorder %v434, 8.507059e+37
        %v436 = vand.u32 %v424, 2147483648
        %v437 = vor.u32 1.1754944e-38, %v436
        %v438 = vsel %vm435, %v437, %v433
        %v439 = vmul.f32 %v421, %v438
        %440 = vrot.lane.b32.xlu0 %v306, 56
        %v441 = vpop.permute.xlu0 %440
        %v444 = vsel %vm312, %v439, 0
        %446 = vmatpush.msra.mxu0 0.0
        %447 = vmatpush.msra.mxu0 0.0
        %448 = vmatpush.msra.mxu0 0.0
        %449 = vmatpush.msra.mxu0 0.0
        %450 = vmatpush.msra.mxu0 0.0
        %451 = vmatpush.msra.mxu0 0.0
        %452 = vmatpush.msra.mxu0 0.0
        %453 = vmatpush.msra.mxu0 0.0
        %454 = vmatpush.msra.mxu0 0.0
        %455 = vmatpush.msra.mxu0 0.0
        %456 = vmatpush.msra.mxu0 0.0
        %457 = vmatpush.msra.mxu0 0.0
        %458 = vmatpush.msra.mxu0 0.0
        %459 = vmatpush.msra.mxu0 0.0
        %460 = vmatpush.msra.mxu0 0.0
        %461 = vmatpush.msra.mxu0 %v441
        %462 = vmatmul.f32.gmra.mxu0 %v444
        %v463 = vpop.f32.mrf.mxu0
        %v464 = vadd.f32 0.0, %v463
        %465 = vdwg.mxu0
        %466 = vrot.lane.b32.xlu0 %v308, 112
        %v467 = vpop.permute.xlu0 %466
        %468 = vrot.lane.b32.xlu0 %v306, 80
        %v469 = vpop.permute.xlu0 %468
        %v470 = vsel %vm312, %v467, 0
        %v472 = vsel %vm312, %v469, 0
        %474 = vmatpush.xpose.msra.mxu0 0.0
        %475 = vmatpush.xpose.msra.mxu0 0.0
        %476 = vmatpush.xpose.msra.mxu0 0.0
        %477 = vmatpush.xpose.msra.mxu0 0.0
        %478 = vmatpush.xpose.msra.mxu0 0.0
        %479 = vmatpush.xpose.msra.mxu0 0.0
        %480 = vmatpush.xpose.msra.mxu0 0.0
        %481 = vmatpush.xpose.msra.mxu0 0.0
        %482 = vmatpush.xpose.msra.mxu0 0.0
        %483 = vmatpush.xpose.msra.mxu0 0.0
        %484 = vmatpush.xpose.msra.mxu0 0.0
        %485 = vmatpush.xpose.msra.mxu0 0.0
        %486 = vmatpush.xpose.msra.mxu0 0.0
        %487 = vmatpush.xpose.msra.mxu0 0.0
        %488 = vmatpush.xpose.msra.mxu0 0.0
        %489 = vmatpush.xpose.msra.mxu0 %v472
        %490 = vmatmul.f32.gmra.mxu0 %v470
        %v491 = vpop.f32.mrf.mxu0
        %v492 = vadd.f32 0.0, %v491
        %493 = vdwg.mxu0
        %v494 = vsel %vm312, %v492, -inf
        %495 = vmax.xlane.f32.xlu0 %v494
        %v496 = vpop.xlane.xlu0 %495
        %v497 = vsub.f32 %v492, %v496
        %v498 = vmul.f32 %v497, 1.442695
        %v499 = vpow.pop %v498
        %v500 = vsel %vm312, %v499, 0.0
        %501 = vadd.xlane.f32.xlu0 %v500
        %v502 = vpop.xlane.xlu0 %501
        %v503 = vrcp.pop %v502
        %v504 = vmul.f32 %v502, %v503
        %v505 = vsub.f32 1.0, %v504
        %v506 = vmul.f32 %v503, %v505
        %v507 = vadd.f32 %v503, %v506
        %vm508 = vweird.f32 %v502
        %vm509 = vweird.f32 %v503
        %vm510 = vmor %vm508, %vm509
        %v511 = vsel %vm510, %v503, %v507
        %v512 = vand.u32 2147483647, %v502
        %vm513 = vcmp.eq.f32.partialorder %v512, 8.507059e+37
        %v514 = vand.u32 %v502, 2147483648
        %v515 = vor.u32 1.1754944e-38, %v514
        %v516 = vsel %vm513, %v515, %v511
        %v517 = vmul.f32 %v499, %v516
        %518 = vrot.lane.b32.xlu0 %v306, 48
        %v519 = vpop.permute.xlu0 %518
        %v522 = vsel %vm312, %v517, 0
        %524 = vmatpush.msra.mxu0 0.0
        %525 = vmatpush.msra.mxu0 0.0
        %526 = vmatpush.msra.mxu0 0.0
        %527 = vmatpush.msra.mxu0 0.0
        %528 = vmatpush.msra.mxu0 0.0
        %529 = vmatpush.msra.mxu0 0.0
        %530 = vmatpush.msra.mxu0 0.0
        %531 = vmatpush.msra.mxu0 0.0
        %532 = vmatpush.msra.mxu0 0.0
        %533 = vmatpush.msra.mxu0 0.0
        %534 = vmatpush.msra.mxu0 0.0
        %535 = vmatpush.msra.mxu0 0.0
        %536 = vmatpush.msra.mxu0 0.0
        %537 = vmatpush.msra.mxu0 0.0
        %538 = vmatpush.msra.mxu0 0.0
        %539 = vmatpush.msra.mxu0 %v519
        %540 = vmatmul.f32.gmra.mxu0 %v522
        %v541 = vpop.f32.mrf.mxu0
        %v542 = vadd.f32 0.0, %v541
        %543 = vdwg.mxu0
        %544 = vrot.lane.b32.xlu0 %v308, 104
        %v545 = vpop.permute.xlu0 %544
        %546 = vrot.lane.b32.xlu0 %v306, 72
        %v547 = vpop.permute.xlu0 %546
        %v548 = vsel %vm312, %v545, 0
        %v550 = vsel %vm312, %v547, 0
        %552 = vmatpush.xpose.msra.mxu0 0.0
        %553 = vmatpush.xpose.msra.mxu0 0.0
        %554 = vmatpush.xpose.msra.mxu0 0.0
        %555 = vmatpush.xpose.msra.mxu0 0.0
        %556 = vmatpush.xpose.msra.mxu0 0.0
        %557 = vmatpush.xpose.msra.mxu0 0.0
        %558 = vmatpush.xpose.msra.mxu0 0.0
        %559 = vmatpush.xpose.msra.mxu0 0.0
        %560 = vmatpush.xpose.msra.mxu0 0.0
        %561 = vmatpush.xpose.msra.mxu0 0.0
        %562 = vmatpush.xpose.msra.mxu0 0.0
        %563 = vmatpush.xpose.msra.mxu0 0.0
        %564 = vmatpush.xpose.msra.mxu0 0.0
        %565 = vmatpush.xpose.msra.mxu0 0.0
        %566 = vmatpush.xpose.msra.mxu0 0.0
        %567 = vmatpush.xpose.msra.mxu0 %v550
        %568 = vmatmul.f32.gmra.mxu0 %v548
        %v569 = vpop.f32.mrf.mxu0
        %v570 = vadd.f32 0.0, %v569
        %571 = vdwg.mxu0
        %v572 = vsel %vm312, %v570, -inf
        %573 = vmax.xlane.f32.xlu0 %v572
        %v574 = vpop.xlane.xlu0 %573
        %v575 = vsub.f32 %v570, %v574
        %v576 = vmul.f32 %v575, 1.442695
        %v577 = vpow.pop %v576
        %v578 = vsel %vm312, %v577, 0.0
        %579 = vadd.xlane.f32.xlu0 %v578
        %v580 = vpop.xlane.xlu0 %579
        %v581 = vrcp.pop %v580
        %v582 = vmul.f32 %v580, %v581
        %v583 = vsub.f32 1.0, %v582
        %v584 = vmul.f32 %v581, %v583
        %v585 = vadd.f32 %v581, %v584
        %vm586 = vweird.f32 %v580
        %vm587 = vweird.f32 %v581
        %vm588 = vmor %vm586, %vm587
        %v589 = vsel %vm588, %v581, %v585
        %v590 = vand.u32 2147483647, %v580
        %vm591 = vcmp.eq.f32.partialorder %v590, 8.507059e+37
        %v592 = vand.u32 %v580, 2147483648
        %v593 = vor.u32 1.1754944e-38, %v592
        %v594 = vsel %vm591, %v593, %v589
        %v595 = vmul.f32 %v577, %v594
        %596 = vrot.lane.b32.xlu0 %v306, 40
        %v597 = vpop.permute.xlu0 %596
        %v600 = vsel %vm312, %v595, 0
        %602 = vmatpush.msra.mxu0 0.0
        %603 = vmatpush.msra.mxu0 0.0
        %604 = vmatpush.msra.mxu0 0.0
        %605 = vmatpush.msra.mxu0 0.0
        %606 = vmatpush.msra.mxu0 0.0
        %607 = vmatpush.msra.mxu0 0.0
        %608 = vmatpush.msra.mxu0 0.0
        %609 = vmatpush.msra.mxu0 0.0
        %610 = vmatpush.msra.mxu0 0.0
        %611 = vmatpush.msra.mxu0 0.0
        %612 = vmatpush.msra.mxu0 0.0
        %613 = vmatpush.msra.mxu0 0.0
        %614 = vmatpush.msra.mxu0 0.0
        %615 = vmatpush.msra.mxu0 0.0
        %616 = vmatpush.msra.mxu0 0.0
        %617 = vmatpush.msra.mxu0 %v597
        %618 = vmatmul.f32.gmra.mxu0 %v600
        %v619 = vpop.f32.mrf.mxu0
        %v620 = vadd.f32 0.0, %v619
        %621 = vdwg.mxu0
        %623 = vrot.lane.b32.xlu0 %v464, 8
        %v624 = vpop.permute.xlu0 %623
        %627 = vrot.lane.b32.xlu0 %v542, 16
        %v628 = vpop.permute.xlu0 %627
        %631 = vrot.lane.b32.xlu0 %v620, 24
        %v632 = vpop.permute.xlu0 %631
        %v634 = vsel %vm312, %v386, %v624
        %vm635 = vcmask 130048
        %v636 = vsel %vm635, %v634, %v628
        %vm637 = vcmask 195584
        %v638 = vsel %vm637, %v636, %v632
        %v639 = vld [vmem:[#allocation7] sm:$0xff]
        %v640 = vld [vmem:[#allocation7 + $0x8] sm:$0xff]
        %v641 = vld [vmem:[#allocation7 + $0x10] sm:$0xff]
        %v642 = vld [vmem:[#allocation7 + $0x18] sm:$0xff]
        %v643 = vld [vmem:[%s4] sm:$0x1]
        %v645 = vperm.slane %v643, 0
        %v648 = vsel %vm284, %v638, 0
        %650 = vmatpush.msra.mxu0 0.0
        %651 = vmatpush.msra.mxu0 0.0
        %652 = vmatpush.msra.mxu0 0.0
        %653 = vmatpush.msra.mxu0 0.0
        %654 = vmatpush.msra.mxu0 0.0
        %655 = vmatpush.msra.mxu0 0.0
        %656 = vmatpush.msra.mxu0 0.0
        %657 = vmatpush.msra.mxu0 0.0
        %658 = vmatpush.msra.mxu0 0.0
        %659 = vmatpush.msra.mxu0 0.0
        %660 = vmatpush.msra.mxu0 0.0
        %661 = vmatpush.msra.mxu0 0.0
        %662 = vmatpush.msra.mxu0 %v642
        %663 = vmatpush.msra.mxu0 %v641
        %664 = vmatpush.msra.mxu0 %v640
        %665 = vmatpush.msra.mxu0 %v639
        %666 = vmatmul.f32.gmra.mxu0 %v648
        %v667 = vpop.f32.mrf.mxu0
        %v668 = vadd.f32 %v645, %v667
        %669 = vdwg.mxu0
        %670 = vst.msk [vmem:[%s274] sm:$0xff] %vm284, %v668
        %s671 = sand.u32 %s141, 1
        %s672 = scalar_lea.sflag [#allocation4], %s671
        %s673 = sand.u32 %s141, 1
        %s674 = smul.addr %s673, 8
        %s675 = scalar_lea.vmem [#allocation8], %s674
        // Predicated region
        $region53: #{tpu_custom_call.1} parent=39 // pred_check
          %p676 = pneg %p151
        $region54: #{tpu_custom_call.1} parent=39 // pred_check_branch
          %678 = sbr.rel (%p676) target = $region56
        $region55: #{tpu_custom_call.1} parent=39 // pred_region
          %680 = vsyncadd %s672, 0
          %s681 = smul.addr %s23, 8
          %s682 = scalar_lea.hbm %s5, %s681
          %s684 = sshll.u32 %s675, 4
          %s685 = int_to_ptr.vmem [resolvable:$true] %s684
          %s686 = sshll.u32 %s682, 4
          %s687 = int_to_ptr.hbm [resolvable:$true] %s686
          %689 = dma.vmem_to_hbm [thread:$0]  %s685, 128, %s687, %s672
        $region56: #{tpu_custom_call.1} parent=39 // pred_fallthru
          _
      $region40: #{tpu_custom_call.1} parent=5 // pred_fallthru
        _
      %p690 = scmp.le.s32.totalorder 2, %s18
      // Predicated region
      $region57: #{tpu_custom_call.1} parent=5 // pred_check
        %p691 = pneg %p690
      $region58: #{tpu_custom_call.1} parent=5 // pred_check_branch
        %693 = sbr.rel (%p691) target = $region60
      $region59: #{tpu_custom_call.1} parent=5 // pred_region
        %s694 = ssub.s32 %s18, 2
        // Predicated region
        $region61: #{tpu_custom_call.1} parent=59 // pred_check
          %p695 = pneg %p157
        $region62: #{tpu_custom_call.1} parent=59 // pred_check_branch
          %697 = sbr.rel (%p695) target = $region64
        $region63: #{tpu_custom_call.1} parent=59 // pred_region
          %s698 = sand.u32 %s142, 1
          %s699 = scalar_lea.sflag [#allocation4], %s698
          %s700 = sand.u32 %s142, 1
          %s701 = smul.addr %s700, 8
          %s702 = scalar_lea.vmem [#allocation8], %s701
          %704 = dma.done %s699, 128
        $region64: #{tpu_custom_call.1} parent=59 // pred_fallthru
          _
      $region60: #{tpu_custom_call.1} parent=5 // pred_fallthru
        _
    $region6: #{tpu_custom_call.1} parent=1 // loop_footer
      %s22 = sadd.s32 1, %s18
    $region7: #{tpu_custom_call.1} parent=1 // loop_footer_branch
      %17 = sbr.rel target = $region3
    $region8: #{tpu_custom_call.1} parent=1 // loop_exit
      _
    %705 = vsyncpa [#allocation3], 1
    %s706 = scalar_lea.sflag [#allocation3], 1
    %707 = vsyncpa %s706, 1
    %708 = vsyncpa [#allocation6], 1
    %709 = vsyncpa [#allocation4], 1
    %s710 = scalar_lea.sflag [#allocation4], 1
    %711 = vsyncpa %s710, 1

</llo_original>
